<compile_context>
chip_gen: v7x
topology: tpu7x:2x2x1
jax: 0.10.0
libtpu: 0.0.40
codegen_flags: <defaults>
</compile_context>

<pallas_src>
import functools

import jax
import jax.numpy as jnp
from jax.experimental import pallas as pl
from jax.experimental.pallas import tpu as pltpu

FEATURES = 128
NUM_ANCHORS = 6
NUM_CLASSES = 7


def _round_up(a, m):
    return -(-a // m) * m


# ---------------------------------------------------------------------------
# Kernel
# ---------------------------------------------------------------------------
def add_kernel(x_ref, w_ref, bias_ref, out_ref, *, k0):
    """x_ref: (TB, k0) bf16; w_ref: (k0+256, 256) bf16; bias_ref: (8, 256) f32;
    out_ref: (TB, 128) f32."""
    x = x_ref[...]                                   # (TB, k0) bf16
    bias = bias_ref[...]                             # (8, 256) f32

    b1 = bias[0:1, :]            # fused channel_reduce∘SK-branch bias (BN folded)
    b2 = bias[1:2, :]            # fused squeeze∘excitation bias
    bn1s = bias[2:3, 0:128]      # BatchNorm1d(eval) scale
    bn1b = bias[2:3, 128:256]    # BatchNorm1d(eval) bias
    b_head = bias[3:4, 0:128]    # fused cls/box head bias

    # Stage 1: channel_reduce folded into both SK grouped-conv branches
    # (center taps, block-diagonal, eval-mode BN folded); 256-wide MXU matmul.
    u = jnp.maximum(
        jnp.dot(x, w_ref[0:k0, :], preferred_element_type=jnp.float32) + b1,
        0.0)                                                      # (TB, 256) f32
    u0 = u[:, 0:128]
    u1 = u[:, 128:256]

    # Stage 2: squeeze FC folded into the two excitation FCs (activation-free
    # in between), one 256-wide matmul.
    s = (u0 + u1).astype(jnp.bfloat16)
    a = jnp.dot(s, w_ref[k0:k0 + 128, :],
                preferred_element_type=jnp.float32) + b2          # (TB, 256)
    a0 = a[:, 0:128]
    a1 = a[:, 128:256]

    # 2-way softmax over branches == sigmoid gate (exact); one EUP tanh.
    g = 0.5 * (jnp.tanh(0.5 * (a0 - a1)) + 1.0)
    v = u1 + (u0 - u1) * g                                        # (TB, 128)

    # BatchNorm1d(eval) + ReLU (not foldable past the data-dependent gate).
    y = jnp.maximum(v * bn1s + bn1b, 0.0).astype(jnp.bfloat16)

    # Fused class/bbox heads (Conv2d k=1 on a 1x1 map): lane-dense 128 output.
    out_ref[...] = jnp.dot(y, w_ref[k0 + 128:k0 + 256, 0:128],
                           preferred_element_type=jnp.float32) + b_head


# ---------------------------------------------------------------------------
# Parameters
# ---------------------------------------------------------------------------
def init_raw_params(key, add_in, features=FEATURES, M=2, G=8, r=16, L=32,
                    num_anchors=NUM_ANCHORS, num_classes=NUM_CLASSES):
    assert M == 2, "kernel is specialized for M=2 SK branches"
    d = max(features // r, L)
    gsz = features // G
    keys = iter(jax.random.split(key, 32))

    def w(shape, fan_in):
        return (jax.random.normal(next(keys), shape, jnp.float32)
                / jnp.sqrt(jnp.float32(fan_in)))

    def b(n):
        return jax.random.normal(next(keys), (n,), jnp.float32) * 0.01

    def grouped_blockdiag():
        # only the center tap of the k=3/5 grouped convs touches a 1x1 map
        blocks = w((G, gsz, gsz), gsz)
        full = jnp.zeros((features, features), jnp.float32)
        for g in range(G):
            full = full.at[g * gsz:(g + 1) * gsz,
                           g * gsz:(g + 1) * gsz].set(blocks[g])
        return full

    raw = {
        "w_cr": w((add_in, features), add_in), "b_cr": b(features),
        "w_sk0": grouped_blockdiag(), "b_sk0": b(features),
        "w_sk1": grouped_blockdiag(), "b_sk1": b(features),
        "w_fc": w((features, d), features), "b_fc": b(d),
        "w_a0": w((d, features), d), "b_a0": b(features),
        "w_a1": w((d, features), d), "b_a1": b(features),
        "w_cls": w((features, num_anchors * num_classes), features),
        "b_cls": b(num_anchors * num_classes),
        "w_box": w((features, num_anchors * 4), features),
        "b_box": b(num_anchors * 4),
        "add_in": add_in, "features": features, "d": d,
        "n_cls": num_anchors * num_classes, "n_box": num_anchors * 4,
        "bn_eps": 1e-5,
    }
    return raw


def pack_params(raw):
    """Fold eval-mode BN + the two activation-free linear pairs, pad to
    lane-dense widths, pack into one bf16 weight slab + one f32 bias slab."""
    f = raw["features"]
    add_in = raw["add_in"]
    n_cls, n_box = raw["n_cls"], raw["n_box"]
    k0 = _round_up(add_in, 128)                       # lane-aligned Cin

    P = jax.lax.Precision.HIGHEST
    dot = functools.partial(jnp.dot, precision=P)
    s_bn = 1.0 / jnp.sqrt(1.0 + raw["bn_eps"])        # eval BN: mean 0, var 1

    # SK branch weights/biases with eval-mode BN2d folded in
    w_sk = jnp.concatenate([raw["w_sk0"], raw["w_sk1"]], axis=1) * s_bn  # (128,256)
    b_sk = jnp.concatenate([raw["b_sk0"], raw["b_sk1"]]) * s_bn          # (256,)

    # Fold 1: channel_reduce ∘ SK-branch convs (no activation in between)
    w1 = dot(raw["w_cr"], w_sk)                                   # (add_in, 256)
    b1 = dot(raw["b_cr"], w_sk) + b_sk                            # (256,)
    w1 = jnp.zeros((k0, 2 * f), jnp.float32).at[:add_in, :].set(w1)

    # Fold 2: squeeze FC ∘ excitation FCs (no activation in between)
    w_a = jnp.concatenate([raw["w_a0"], raw["w_a1"]], axis=1)     # (d, 256)
    b_a = jnp.concatenate([raw["b_a0"], raw["b_a1"]])             # (256,)
    w2 = dot(raw["w_fc"], w_a)                                    # (128, 256)
    b2 = dot(raw["b_fc"], w_a) + b_a                              # (256,)

    # BatchNorm1d (eval, init stats) after the SK merge
    bn1_scale = jnp.full((f,), s_bn, jnp.float32)
    bn1_bias = jnp.zeros((f,), jnp.float32)

    # Fused, lane-padded cls/box heads (placed in the first 128 lanes)
    w3 = jnp.zeros((f, 2 * f), jnp.float32)
    w3 = w3.at[:, :n_cls].set(raw["w_cls"])
    w3 = w3.at[:, n_cls:n_cls + n_box].set(raw["w_box"])
    b_head = jnp.zeros((f,), jnp.float32)
    b_head = b_head.at[:n_cls].set(raw["b_cls"])
    b_head = b_head.at[n_cls:n_cls + n_box].set(raw["b_box"])

    # --- slabs: one bf16 weight slab, one f32 bias/BN slab -----------------
    w_slab = jnp.concatenate([w1, w2, w3], axis=0).astype(jnp.bfloat16)  # (k0+256,256)

    bias = jnp.zeros((8, 256), jnp.float32)
    bias = bias.at[0, :].set(b1)
    bias = bias.at[1, :].set(b2)
    bias = bias.at[2, 0:128].set(bn1_scale)
    bias = bias.at[2, 128:256].set(bn1_bias)
    bias = bias.at[3, 0:128].set(b_head)

    return {"w": w_slab, "bias": bias, "k0": k0, "add_in": add_in,
            "n_cls": n_cls, "n_box": n_box}


# ---------------------------------------------------------------------------
# Wrapper
# ---------------------------------------------------------------------------
def add_forward(x, params):
    B = x.shape[0]
    k0 = params["k0"]
    add_in = params["add_in"]

    xin = x.reshape(B, -1).astype(jnp.float32)        # x.view(B, -1, 1, 1)
    assert xin.shape[1] == add_in, (xin.shape, add_in)
    if k0 != add_in:
        xin = jnp.pad(xin, ((0, 0), (0, k0 - add_in)))
    xin = xin.astype(jnp.bfloat16)                    # halve activation DMA bytes

    # Batch tiling: 16-row (bf16 sublane-pack) aligned tiles; >=2 grid steps
    # whenever B > 16 so the "parallel" axis shards across both v7x TCs;
    # 1024-row cap amortizes the ~0.35us per-step overhead at large B.
    SUB = 16
    CAP = 1024
    bp = _round_up(B, SUB)
    if bp <= SUB:
        tb = bp
    else:
        tb = min(CAP, _round_up(-(-bp // 2), SUB))
        bp = _round_up(bp, tb)
    if bp != B:
        xin = jnp.pad(xin, ((0, bp - xin.shape[0], ), (0, 0))) \
            if xin.shape[0] != bp else xin

    kernel = functools.partial(add_kernel, k0=k0)
    flops = 2 * bp * (k0 * 256 + 128 * 256 + 128 * 128)
    bytes_accessed = (bp * k0 * 2                       # activations (bf16)
                      + (k0 + 256) * 256 * 2            # weight slab (bf16)
                      + 8 * 256 * 4                     # bias slab (f32)
                      + bp * 128 * 4)                   # output (f32)

    out = pl.pallas_call(
        kernel,
        out_shape=jax.ShapeDtypeStruct((bp, 128), jnp.float32),
        grid_spec=pltpu.PrefetchScalarGridSpec(
            num_scalar_prefetch=0,
            grid=(bp // tb,),
            in_specs=[
                pl.BlockSpec((tb, k0), lambda i: (i, 0)),            # activations
                pl.BlockSpec((k0 + 256, 256), lambda i: (0, 0)),     # weight slab
                pl.BlockSpec((8, 256), lambda i: (0, 0)),            # bias/BN slab
            ],
            out_specs=pl.BlockSpec((tb, 128), lambda i: (i, 0)),
        ),
        compiler_params=pltpu.CompilerParams(
            dimension_semantics=("parallel",)),
        cost_estimate=pl.CostEstimate(
            flops=flops, transcendentals=bp * 128,
            bytes_accessed=bytes_accessed),
    )(xin, params["w"], params["bias"])

    n_cls, n_box = params["n_cls"], params["n_box"]
    cls = out[:B, :n_cls]
    box = out[:B, n_cls:n_cls + n_box]
    return cls, box


# ---------------------------------------------------------------------------
# Pure-JAX reference (unfused math on the raw params) — validates the folds.
# ---------------------------------------------------------------------------
def reference_forward(x, raw):
    P = jax.lax.Precision.HIGHEST
    dot = lambda a, b: jnp.dot(a, b, precision=P)
    B = x.shape[0]
    xin = x.reshape(B, -1).astype(jnp.float32)
    s_bn = 1.0 / jnp.sqrt(1.0 + raw["bn_eps"])

    h = dot(xin, raw["w_cr"]) + raw["b_cr"]
    u0 = jnp.maximum((dot(h, raw["w_sk0"]) + raw["b_sk0"]) * s_bn, 0.0)
    u1 = jnp.maximum((dot(h, raw["w_sk1"]) + raw["b_sk1"]) * s_bn, 0.0)
    z = dot(u0 + u1, raw["w_fc"]) + raw["b_fc"]
    a0 = dot(z, raw["w_a0"]) + raw["b_a0"]
    a1 = dot(z, raw["w_a1"]) + raw["b_a1"]
    m = jnp.maximum(a0, a1)
    e0, e1 = jnp.exp(a0 - m), jnp.exp(a1 - m)
    den = e0 + e1
    v = u0 * (e0 / den) + u1 * (e1 / den)
    y = jnp.maximum(v * s_bn, 0.0)
    cls = dot(y, raw["w_cls"]) + raw["b_cls"]
    box = dot(y, raw["w_box"]) + raw["b_box"]
    return cls, box


if __name__ == "__main__":
    B = 2
    ADD_IN = 256  # = 4 * 8 * 8 after the view(B, -1, 1, 1)

    x = jax.random.normal(jax.random.PRNGKey(0), (B, 4, 8, 8), dtype=jnp.float32)
    raw = init_raw_params(jax.random.PRNGKey(1), ADD_IN)
    params = pack_params(raw)

    cls, box = add_forward(x, params)
    jax.block_until_ready((cls, box))

    assert cls.shape == (B, NUM_ANCHORS * NUM_CLASSES), cls.shape
    assert box.shape == (B, NUM_ANCHORS * 4), box.shape
    assert bool(jnp.all(jnp.isfinite(cls))) and bool(jnp.all(jnp.isfinite(box)))

    # tolerance reflects bf16 MXU inputs vs the HIGHEST-precision f32 reference
    cls_ref, box_ref = reference_forward(x, raw)
    max_diff = float(jnp.maximum(jnp.max(jnp.abs(cls - cls_ref)),
                                 jnp.max(jnp.abs(box - box_ref))))
    assert max_diff < 8e-2, f"mismatch vs reference: {max_diff}"

    print("KERNEL_OK")
</pallas_src>

<mosaic_0001>
module attributes {stable_mosaic.version = 11 : i64} {
  func.func @add_kernel(%arg0: i32, %arg1: memref<16x256xbf16, #tpu.memory_space<vmem>>, %arg2: memref<512x256xbf16, #tpu.memory_space<vmem>>, %arg3: memref<8x256xf32, #tpu.memory_space<vmem>>, %arg4: memref<16x128xf32, #tpu.memory_space<vmem>>) attributes {dimension_semantics = [#tpu.dimension_semantics<parallel>], iteration_bounds = array<i64: 1>, scalar_prefetch = 0 : i64, scratch_operands = 0 : i64, tpu.core_type = #tpu.core_type<tc>, window_params = [{transform_indices = @transform_0, window_bounds = array<i64: 16, 256>}, {pipeline_mode = #tpu.pipeline_mode<synchronous>, transform_indices = @transform_1, window_bounds = array<i64: 512, 256>}, {pipeline_mode = #tpu.pipeline_mode<synchronous>, transform_indices = @transform_2, window_bounds = array<i64: 8, 256>}, {transform_indices = @transform_3, window_bounds = array<i64: 16, 128>}]} {
    %c0 = arith.constant 0 : index
    %c0_0 = arith.constant 0 : index
    %0 = vector.load %arg1[%c0, %c0_0] : memref<16x256xbf16, #tpu.memory_space<vmem>>, vector<16x256xbf16>
    %c0_1 = arith.constant 0 : index
    %c0_2 = arith.constant 0 : index
    %1 = vector.load %arg3[%c0_1, %c0_2] : memref<8x256xf32, #tpu.memory_space<vmem>>, vector<8x256xf32>
    %2 = vector.extract_strided_slice %1 {offsets = [0, 0], sizes = [1, 256], strides = [1, 1]} : vector<8x256xf32> to vector<1x256xf32>
    %3 = vector.extract_strided_slice %1 {offsets = [1, 0], sizes = [1, 256], strides = [1, 1]} : vector<8x256xf32> to vector<1x256xf32>
    %4 = vector.extract_strided_slice %1 {offsets = [2, 0], sizes = [1, 128], strides = [1, 1]} : vector<8x256xf32> to vector<1x128xf32>
    %5 = vector.extract_strided_slice %1 {offsets = [2, 128], sizes = [1, 128], strides = [1, 1]} : vector<8x256xf32> to vector<1x128xf32>
    %6 = vector.extract_strided_slice %1 {offsets = [3, 0], sizes = [1, 128], strides = [1, 1]} : vector<8x256xf32> to vector<1x128xf32>
    %c0_3 = arith.constant 0 : index
    %c0_4 = arith.constant 0 : index
    %7 = vector.load %arg2[%c0_3, %c0_4] : memref<512x256xbf16, #tpu.memory_space<vmem>>, vector<256x256xbf16>
    %cst = arith.constant dense<0.000000e+00> : vector<16x256xf32>
    %8 = tpu.matmul %0, %7, %cst {dimension_numbers = #tpu.dot_dimension_numbers<[1], [0], [0], [1], [0, 0, 1, 1], [], []>} : vector<16x256xbf16>, vector<256x256xbf16>, vector<16x256xf32> -> vector<16x256xf32>
    %9 = vector.broadcast %2 : vector<1x256xf32> to vector<16x256xf32>
    %10 = arith.addf %8, %9 : vector<16x256xf32>
    %cst_5 = arith.constant 0.000000e+00 : f32
    %11 = vector.broadcast %cst_5 : f32 to vector<16x256xf32>
    %12 = arith.maximumf %10, %11 : vector<16x256xf32>
    %13 = vector.extract_strided_slice %12 {offsets = [0, 0], sizes = [16, 128], strides = [1, 1]} : vector<16x256xf32> to vector<16x128xf32>
    %14 = vector.extract_strided_slice %12 {offsets = [0, 128], sizes = [16, 128], strides = [1, 1]} : vector<16x256xf32> to vector<16x128xf32>
    %15 = arith.addf %13, %14 : vector<16x128xf32>
    %16 = arith.truncf %15 : vector<16x128xf32> to vector<16x128xbf16>
    %c256 = arith.constant 256 : index
    %c0_6 = arith.constant 0 : index
    %17 = vector.load %arg2[%c256, %c0_6] : memref<512x256xbf16, #tpu.memory_space<vmem>>, vector<128x256xbf16>
    %cst_7 = arith.constant dense<0.000000e+00> : vector<16x256xf32>
    %18 = tpu.matmul %16, %17, %cst_7 {dimension_numbers = #tpu.dot_dimension_numbers<[1], [0], [0], [1], [0, 0, 1, 1], [], []>} : vector<16x128xbf16>, vector<128x256xbf16>, vector<16x256xf32> -> vector<16x256xf32>
    %19 = vector.broadcast %3 : vector<1x256xf32> to vector<16x256xf32>
    %20 = arith.addf %18, %19 : vector<16x256xf32>
    %21 = vector.extract_strided_slice %20 {offsets = [0, 0], sizes = [16, 128], strides = [1, 1]} : vector<16x256xf32> to vector<16x128xf32>
    %22 = vector.extract_strided_slice %20 {offsets = [0, 128], sizes = [16, 128], strides = [1, 1]} : vector<16x256xf32> to vector<16x128xf32>
    %23 = arith.subf %21, %22 : vector<16x128xf32>
    %cst_8 = arith.constant 5.000000e-01 : f32
    %24 = vector.broadcast %cst_8 : f32 to vector<16x128xf32>
    %25 = arith.mulf %24, %23 : vector<16x128xf32>
    %26 = math.tanh %25 : vector<16x128xf32>
    %cst_9 = arith.constant 1.000000e+00 : f32
    %27 = vector.broadcast %cst_9 : f32 to vector<16x128xf32>
    %28 = arith.addf %26, %27 : vector<16x128xf32>
    %cst_10 = arith.constant 5.000000e-01 : f32
    %29 = vector.broadcast %cst_10 : f32 to vector<16x128xf32>
    %30 = arith.mulf %29, %28 : vector<16x128xf32>
    %31 = arith.subf %13, %14 : vector<16x128xf32>
    %32 = arith.mulf %31, %30 : vector<16x128xf32>
    %33 = arith.addf %14, %32 : vector<16x128xf32>
    %34 = vector.broadcast %4 : vector<1x128xf32> to vector<16x128xf32>
    %35 = arith.mulf %33, %34 : vector<16x128xf32>
    %36 = vector.broadcast %5 : vector<1x128xf32> to vector<16x128xf32>
    %37 = arith.addf %35, %36 : vector<16x128xf32>
    %cst_11 = arith.constant 0.000000e+00 : f32
    %38 = vector.broadcast %cst_11 : f32 to vector<16x128xf32>
    %39 = arith.maximumf %37, %38 : vector<16x128xf32>
    %40 = arith.truncf %39 : vector<16x128xf32> to vector<16x128xbf16>
    %c384 = arith.constant 384 : index
    %c0_12 = arith.constant 0 : index
    %41 = vector.load %arg2[%c384, %c0_12] : memref<512x256xbf16, #tpu.memory_space<vmem>>, vector<128x128xbf16>
    %cst_13 = arith.constant dense<0.000000e+00> : vector<16x128xf32>
    %42 = tpu.matmul %40, %41, %cst_13 {dimension_numbers = #tpu.dot_dimension_numbers<[1], [0], [0], [1], [0, 0, 1, 1], [], []>} : vector<16x128xbf16>, vector<128x128xbf16>, vector<16x128xf32> -> vector<16x128xf32>
    %43 = vector.broadcast %6 : vector<1x128xf32> to vector<16x128xf32>
    %44 = arith.addf %42, %43 : vector<16x128xf32>
    %c0_14 = arith.constant 0 : index
    %c0_15 = arith.constant 0 : index
    %45 = vector.load %arg4[%c0_14, %c0_15] : memref<16x128xf32, #tpu.memory_space<vmem>>, vector<16x128xf32>
    tpu.vector_store %arg4[%c0_14, %c0_15], %44 {strides = array<i32>} : memref<16x128xf32, #tpu.memory_space<vmem>>, vector<16x128xf32>,
    return
  }
  func.func @transform_0(%arg0: i32) -> (i32, i32) {
    %c0_i32 = arith.constant 0 : i32
    %c0_i32_0 = arith.constant 0 : i32
    return %arg0, %c0_i32 : i32, i32
  }
  func.func @transform_1(%arg0: i32) -> (i32, i32) {
    %c0_i32 = arith.constant 0 : i32
    %c0_i32_0 = arith.constant 0 : i32
    %c0_i32_1 = arith.constant 0 : i32
    return %c0_i32, %c0_i32_0 : i32, i32
  }
  func.func @transform_2(%arg0: i32) -> (i32, i32) {
    %c0_i32 = arith.constant 0 : i32
    %c0_i32_0 = arith.constant 0 : i32
    %c0_i32_1 = arith.constant 0 : i32
    return %c0_i32, %c0_i32_0 : i32, i32
  }
  func.func @transform_3(%arg0: i32) -> (i32, i32) {
    %c0_i32 = arith.constant 0 : i32
    %c0_i32_0 = arith.constant 0 : i32
    return %arg0, %c0_i32 : i32, i32
  }
}

</mosaic_0001>

<llo_original>
// kernel: tpu_custom_call.1
$region0: #{tpu_custom_call.1}
  #allocation0 [shape = 'u32[]', space=smem, size = 0x4, offset = 0x4, fixed_abs, tag = 'smem constant byte address 0x4 - core index']
  #allocation1 [shape = 'u32[144,128]{1,0:T(1,128)}', space=vmem, size = 0x12000, scoped, tag = 'internal scratch']
  %s0 = inlined_call_operand.hbm [shape: bf16[16,256], index: 0, kind: input, shape index: {}]
  %s1 = inlined_call_operand.hbm [shape: bf16[512,256], index: 1, kind: input, shape index: {}]
  %s2 = inlined_call_operand.hbm [shape: f32[8,256], index: 2, kind: input, shape index: {}]
  %s3 = inlined_call_operand.hbm [shape: f32[16,128], index: 3, kind: output, shape index: {}]
  %s4 = sld [smem:[#allocation0]]
  $region34: #{tpu_custom_call.1} parent=0
    _
  %s6 = ssub.s32 1, %s4
  %s7 = scalar_select 0, %s6, %s4
  $region1: #{tpu_custom_call.1} parent=0
    #allocation2 [shape = 'u8[8192]{0}', space=vmem, size = 0x2000, scoped, tag = 'input window, operand 0, single buffered']
    #allocation3 [shape = 's32[1]{0}', space=sflag, size = 0x4, scoped, tag = 'scoped memory for tpu_custom_call.1']
    #allocation4 [shape = 's32[1]{0}', space=sflag, size = 0x4, scoped, tag = 'scoped memory for tpu_custom_call.1']
    #allocation5 [shape = 'u8[262144]{0}', space=vmem, size = 0x40000, scoped, tag = 'input window, operand 1, single buffered']
    #allocation6 [shape = 's32[1]{0}', space=sflag, size = 0x4, scoped, tag = 'scoped memory for tpu_custom_call.1']
    #allocation7 [shape = 'u8[8192]{0}', space=vmem, size = 0x2000, scoped, tag = 'input window, operand 2, single buffered']
    #allocation8 [shape = 'u8[8192]{0}', space=vmem, size = 0x2000, scoped, tag = 'output window, operand 0, single buffered']
    %8 = vsyncpa [#allocation3], 0
    %9 = vsyncpa [#allocation6], 0
    %10 = vsyncpa [#allocation4], 0
    // Predicated region
    $region2: #{tpu_custom_call.1} parent=1 // pred_check
      _
    $region3: #{tpu_custom_call.1} parent=1 // pred_check_branch
      %12 = sbr.rel (0) target = $region5
    $region4: #{tpu_custom_call.1} parent=1 // pred_region
      %s14 = ssub.s32 256, 256
      %15 = vsyncadd [#allocation3], %s14
      %s16 = sshll.u32 [#allocation2], 4
      %s17 = int_to_ptr.vmem [resolvable:$true] %s16
      %22 = dma.hbm_to_vmem [thread:$0]  %s0, 256, %s17, [#allocation3], 128, 128, 8
    $region5: #{tpu_custom_call.1} parent=1 // pred_fallthru
      _
    // Predicated region
    $region6: #{tpu_custom_call.1} parent=1 // pred_check
      _
    $region7: #{tpu_custom_call.1} parent=1 // pred_check_branch
      %24 = sbr.rel (0) target = $region9
    $region8: #{tpu_custom_call.1} parent=1 // pred_region
      %s26 = ssub.s32 8192, 8192
      %27 = vsyncadd [#allocation6], %s26
      %s28 = sshll.u32 [#allocation5], 4
      %s29 = int_to_ptr.vmem [resolvable:$true] %s28
      %34 = dma.hbm_to_vmem [thread:$0]  %s1, 8192, %s29, [#allocation6], 128, 128, 8
    $region9: #{tpu_custom_call.1} parent=1 // pred_fallthru
      _
    // Predicated region
    $region10: #{tpu_custom_call.1} parent=1 // pred_check
      _
    $region11: #{tpu_custom_call.1} parent=1 // pred_check_branch
      %36 = sbr.rel (0) target = $region13
    $region12: #{tpu_custom_call.1} parent=1 // pred_region
      %s38 = ssub.s32 256, 256
      %39 = vsyncadd [#allocation6], %s38
      %s41 = sshll.u32 [#allocation7], 4
      %s42 = int_to_ptr.vmem [resolvable:$true] %s41
      %44 = dma.hbm_to_vmem [thread:$0]  %s2, 256, %s42, [#allocation6]
    $region13: #{tpu_custom_call.1} parent=1 // pred_fallthru
      _
    // Predicated region
    $region14: #{tpu_custom_call.1} parent=1 // pred_check
      _
    $region15: #{tpu_custom_call.1} parent=1 // pred_check_branch
      %46 = sbr.rel (0) target = $region17
    $region16: #{tpu_custom_call.1} parent=1 // pred_region
      %47 = dma.done [#allocation3], 256
    $region17: #{tpu_custom_call.1} parent=1 // pred_fallthru
      _
    // Predicated region
    $region18: #{tpu_custom_call.1} parent=1 // pred_check
      _
    $region19: #{tpu_custom_call.1} parent=1 // pred_check_branch
      %49 = sbr.rel (0) target = $region21
    $region20: #{tpu_custom_call.1} parent=1 // pred_region
      %50 = dma.done [#allocation6], 8192
    $region21: #{tpu_custom_call.1} parent=1 // pred_fallthru
      _
    // Predicated region
    $region22: #{tpu_custom_call.1} parent=1 // pred_check
      _
    $region23: #{tpu_custom_call.1} parent=1 // pred_check_branch
      %52 = sbr.rel (0) target = $region25
    $region24: #{tpu_custom_call.1} parent=1 // pred_region
      %53 = dma.done [#allocation6], 256
    $region25: #{tpu_custom_call.1} parent=1 // pred_fallthru
      _
    %v55 = vld [vmem:[#allocation2] sm:$0xff]
    %v56 = vld [vmem:[#allocation2 + $0x8] sm:$0xff]
    %v57 = vld [vmem:[#allocation7] sm:$0xff]
    %v58 = vld [vmem:[#allocation7 + $0x8] sm:$0xff]
    %v59 = vld [vmem:[#allocation5] sm:$0xff]
    %v60 = vld [vmem:[#allocation5 + $0x8] sm:$0xff]
    %v61 = vld [vmem:[#allocation5 + $0x10] sm:$0xff]
    %v62 = vld [vmem:[#allocation5 + $0x18] sm:$0xff]
    %v63 = vld [vmem:[#allocation5 + $0x20] sm:$0xff]
    %v64 = vld [vmem:[#allocation5 + $0x28] sm:$0xff]
    %v65 = vld [vmem:[#allocation5 + $0x30] sm:$0xff]
    %v66 = vld [vmem:[#allocation5 + $0x38] sm:$0xff]
    %v67 = vld [vmem:[#allocation5 + $0x40] sm:$0xff]
    %v68 = vld [vmem:[#allocation5 + $0x48] sm:$0xff]
    %v69 = vld [vmem:[#allocation5 + $0x50] sm:$0xff]
    %v70 = vld [vmem:[#allocation5 + $0x58] sm:$0xff]
    %v71 = vld [vmem:[#allocation5 + $0x60] sm:$0xff]
    %v72 = vld [vmem:[#allocation5 + $0x68] sm:$0xff]
    %v73 = vld [vmem:[#allocation5 + $0x70] sm:$0xff]
    %v74 = vld [vmem:[#allocation5 + $0x78] sm:$0xff]
    %v75 = vld [vmem:[#allocation5 + $0x80] sm:$0xff]
    %v76 = vld [vmem:[#allocation5 + $0x88] sm:$0xff]
    %v77 = vld [vmem:[#allocation5 + $0x90] sm:$0xff]
    %v78 = vld [vmem:[#allocation5 + $0x98] sm:$0xff]
    %v79 = vld [vmem:[#allocation5 + $0xa0] sm:$0xff]
    %v80 = vld [vmem:[#allocation5 + $0xa8] sm:$0xff]
    %v81 = vld [vmem:[#allocation5 + $0xb0] sm:$0xff]
    %v82 = vld [vmem:[#allocation5 + $0xb8] sm:$0xff]
    %v83 = vld [vmem:[#allocation5 + $0xc0] sm:$0xff]
    %v84 = vld [vmem:[#allocation5 + $0xc8] sm:$0xff]
    %v85 = vld [vmem:[#allocation5 + $0xd0] sm:$0xff]
    %v86 = vld [vmem:[#allocation5 + $0xd8] sm:$0xff]
    %v87 = vld [vmem:[#allocation5 + $0xe0] sm:$0xff]
    %v88 = vld [vmem:[#allocation5 + $0xe8] sm:$0xff]
    %v89 = vld [vmem:[#allocation5 + $0xf0] sm:$0xff]
    %v90 = vld [vmem:[#allocation5 + $0xf8] sm:$0xff]
    %v91 = vlaneseq
    %v92 = vshrl.u32 %v91, 7
    %v93 = vsub.s32 0, %v92
    %v94 = vrot.slane %v57, %v93
    %v95 = vlaneseq
    %v96 = vshrl.u32 %v95, 7
    %v97 = vsub.s32 0, %v96
    %v98 = vrot.slane %v58, %v97
    %v101 = vunpack.c.l.b16 %v55
    %v102 = vunpack.c.h.b16 %v55
    %v103 = vunpack.c.l.b16 %v56
    %v104 = vunpack.c.h.b16 %v56
    %v105 = vpack.c.b16 %v103, %v101
    %v106 = vpack.c.b16 %v104, %v102
    %v141 = vunpack.c.l.b16 %v59
    %v142 = vunpack.c.h.b16 %v59
    %v143 = vunpack.c.l.b16 %v60
    %v144 = vunpack.c.h.b16 %v60
    %v145 = vunpack.c.l.b16 %v61
    %v146 = vunpack.c.h.b16 %v61
    %v147 = vunpack.c.l.b16 %v62
    %v148 = vunpack.c.h.b16 %v62
    %v149 = vunpack.c.l.b16 %v63
    %v150 = vunpack.c.h.b16 %v63
    %v151 = vunpack.c.l.b16 %v64
    %v152 = vunpack.c.h.b16 %v64
    %v153 = vunpack.c.l.b16 %v65
    %v154 = vunpack.c.h.b16 %v65
    %v155 = vunpack.c.l.b16 %v66
    %v156 = vunpack.c.h.b16 %v66
    %v157 = vunpack.c.l.b16 %v67
    %v158 = vunpack.c.h.b16 %v67
    %v159 = vunpack.c.l.b16 %v68
    %v160 = vunpack.c.h.b16 %v68
    %v161 = vunpack.c.l.b16 %v69
    %v162 = vunpack.c.h.b16 %v69
    %v163 = vunpack.c.l.b16 %v70
    %v164 = vunpack.c.h.b16 %v70
    %v165 = vunpack.c.l.b16 %v71
    %v166 = vunpack.c.h.b16 %v71
    %v167 = vunpack.c.l.b16 %v72
    %v168 = vunpack.c.h.b16 %v72
    %v169 = vunpack.c.l.b16 %v73
    %v170 = vunpack.c.h.b16 %v73
    %v171 = vunpack.c.l.b16 %v74
    %v172 = vunpack.c.h.b16 %v74
    %v173 = vunpack.c.l.b16 %v75
    %v174 = vunpack.c.h.b16 %v75
    %v175 = vunpack.c.l.b16 %v76
    %v176 = vunpack.c.h.b16 %v76
    %v177 = vunpack.c.l.b16 %v77
    %v178 = vunpack.c.h.b16 %v77
    %v179 = vunpack.c.l.b16 %v78
    %v180 = vunpack.c.h.b16 %v78
    %v181 = vunpack.c.l.b16 %v79
    %v182 = vunpack.c.h.b16 %v79
    %v183 = vunpack.c.l.b16 %v80
    %v184 = vunpack.c.h.b16 %v80
    %v185 = vunpack.c.l.b16 %v81
    %v186 = vunpack.c.h.b16 %v81
    %v187 = vunpack.c.l.b16 %v82
    %v188 = vunpack.c.h.b16 %v82
    %v189 = vunpack.c.l.b16 %v83
    %v190 = vunpack.c.h.b16 %v83
    %v191 = vunpack.c.l.b16 %v84
    %v192 = vunpack.c.h.b16 %v84
    %v193 = vunpack.c.l.b16 %v85
    %v194 = vunpack.c.h.b16 %v85
    %v195 = vunpack.c.l.b16 %v86
    %v196 = vunpack.c.h.b16 %v86
    %v197 = vunpack.c.l.b16 %v87
    %v198 = vunpack.c.h.b16 %v87
    %v199 = vunpack.c.l.b16 %v88
    %v200 = vunpack.c.h.b16 %v88
    %v201 = vunpack.c.l.b16 %v89
    %v202 = vunpack.c.h.b16 %v89
    %v203 = vunpack.c.l.b16 %v90
    %v204 = vunpack.c.h.b16 %v90
    %v205 = vpack.c.b16 %v143, %v141
    %v206 = vpack.c.b16 %v144, %v142
    %v207 = vpack.c.b16 %v147, %v145
    %v208 = vpack.c.b16 %v148, %v146
    %v209 = vpack.c.b16 %v151, %v149
    %v210 = vpack.c.b16 %v152, %v150
    %v211 = vpack.c.b16 %v155, %v153
    %v212 = vpack.c.b16 %v156, %v154
    %v213 = vpack.c.b16 %v159, %v157
    %v214 = vpack.c.b16 %v160, %v158
    %v215 = vpack.c.b16 %v163, %v161
    %v216 = vpack.c.b16 %v164, %v162
    %v217 = vpack.c.b16 %v167, %v165
    %v218 = vpack.c.b16 %v168, %v166
    %v219 = vpack.c.b16 %v171, %v169
    %v220 = vpack.c.b16 %v172, %v170
    %v221 = vpack.c.b16 %v175, %v173
    %v222 = vpack.c.b16 %v176, %v174
    %v223 = vpack.c.b16 %v179, %v177
    %v224 = vpack.c.b16 %v180, %v178
    %v225 = vpack.c.b16 %v183, %v181
    %v226 = vpack.c.b16 %v184, %v182
    %v227 = vpack.c.b16 %v187, %v185
    %v228 = vpack.c.b16 %v188, %v186
    %v229 = vpack.c.b16 %v191, %v189
    %v230 = vpack.c.b16 %v192, %v190
    %v231 = vpack.c.b16 %v195, %v193
    %v232 = vpack.c.b16 %v196, %v194
    %v233 = vpack.c.b16 %v199, %v197
    %v234 = vpack.c.b16 %v200, %v198
    %v235 = vpack.c.b16 %v203, %v201
    %v236 = vpack.c.b16 %v204, %v202
    %269 = vmatprep.subr.bf16.mxu0 %v206
    %270 = vmatpush1.bf16.msra.mxu0 %v205
    %271 = vmatprep.subr.bf16.mxu0 %v208
    %272 = vmatpush1.bf16.msra.mxu0 %v207
    %273 = vmatprep.subr.bf16.mxu0 %v210
    %274 = vmatpush1.bf16.msra.mxu0 %v209
    %275 = vmatprep.subr.bf16.mxu0 %v212
    %276 = vmatpush1.bf16.msra.mxu0 %v211
    %277 = vmatprep.subr.bf16.mxu0 %v214
    %278 = vmatpush1.bf16.msra.mxu0 %v213
    %279 = vmatprep.subr.bf16.mxu0 %v216
    %280 = vmatpush1.bf16.msra.mxu0 %v215
    %281 = vmatprep.subr.bf16.mxu0 %v218
    %282 = vmatpush1.bf16.msra.mxu0 %v217
    %283 = vmatprep.subr.bf16.mxu0 %v220
    %284 = vmatpush1.bf16.msra.mxu0 %v219
    %285 = vmatprep.subr.bf16.mxu0 %v222
    %286 = vmatpush1.bf16.msra.mxu0 %v221
    %287 = vmatprep.subr.bf16.mxu0 %v224
    %288 = vmatpush1.bf16.msra.mxu0 %v223
    %289 = vmatprep.subr.bf16.mxu0 %v226
    %290 = vmatpush1.bf16.msra.mxu0 %v225
    %291 = vmatprep.subr.bf16.mxu0 %v228
    %292 = vmatpush1.bf16.msra.mxu0 %v227
    %293 = vmatprep.subr.bf16.mxu0 %v230
    %294 = vmatpush1.bf16.msra.mxu0 %v229
    %295 = vmatprep.subr.bf16.mxu0 %v232
    %296 = vmatpush1.bf16.msra.mxu0 %v231
    %297 = vmatprep.subr.bf16.mxu0 %v234
    %298 = vmatpush1.bf16.msra.mxu0 %v233
    %299 = vmatprep.subr.bf16.mxu0 %v236
    %300 = vmatpush1.bf16.msra.mxu0 %v235
    %301 = vmatprep.mubr.bf16.mxu0 %v106
    %302 = vmatmul.mubr.bf16.gmra.mrb[0].mxu0 %v105
    %v303 = vpop.f32.mrb[0].mxu0
    %v304 = vadd.f32 %v94, %v303
    %v305 = vpop.f32.mrb[0].mxu0
    %v306 = vadd.f32 %v98, %v305
    %v307 = vpop.f32.mrb[0].mxu0
    %v308 = vadd.f32 %v94, %v307
    %v309 = vpop.f32.mrb[0].mxu0
    %v310 = vadd.f32 %v98, %v309
    %311 = vdwg.mxu0
    %v312 = vmax.f32 %v304, 0.0
    %v313 = vmax.f32 %v306, 0.0
    %v314 = vmax.f32 %v308, 0.0
    %v315 = vmax.f32 %v310, 0.0
    %v316 = vadd.f32 %v312, %v313
    %v317 = vadd.f32 %v314, %v315
    %v318 = vpack.c.bf16 %v317, %v316
    %v319 = vld [vmem:[#allocation5 + $0x100] sm:$0xff]
    %v320 = vld [vmem:[#allocation5 + $0x108] sm:$0xff]
    %v321 = vld [vmem:[#allocation5 + $0x110] sm:$0xff]
    %v322 = vld [vmem:[#allocation5 + $0x118] sm:$0xff]
    %v323 = vld [vmem:[#allocation5 + $0x120] sm:$0xff]
    %v324 = vld [vmem:[#allocation5 + $0x128] sm:$0xff]
    %v325 = vld [vmem:[#allocation5 + $0x130] sm:$0xff]
    %v326 = vld [vmem:[#allocation5 + $0x138] sm:$0xff]
    %v327 = vld [vmem:[#allocation5 + $0x140] sm:$0xff]
    %v328 = vld [vmem:[#allocation5 + $0x148] sm:$0xff]
    %v329 = vld [vmem:[#allocation5 + $0x150] sm:$0xff]
    %v330 = vld [vmem:[#allocation5 + $0x158] sm:$0xff]
    %v331 = vld [vmem:[#allocation5 + $0x160] sm:$0xff]
    %v332 = vld [vmem:[#allocation5 + $0x168] sm:$0xff]
    %v333 = vld [vmem:[#allocation5 + $0x170] sm:$0xff]
    %v334 = vld [vmem:[#allocation5 + $0x178] sm:$0xff]
    %v335 = vlaneseq
    %v336 = vshrl.u32 %v335, 7
    %v337 = vsub.s32 1, %v336
    %v338 = vrot.slane %v57, %v337
    %v339 = vlaneseq
    %v340 = vshrl.u32 %v339, 7
    %v341 = vsub.s32 1, %v340
    %v342 = vrot.slane %v58, %v341
    %v359 = vunpack.c.l.b16 %v319
    %v360 = vunpack.c.h.b16 %v319
    %v361 = vunpack.c.l.b16 %v320
    %v362 = vunpack.c.h.b16 %v320
    %v363 = vunpack.c.l.b16 %v321
    %v364 = vunpack.c.h.b16 %v321
    %v365 = vunpack.c.l.b16 %v322
    %v366 = vunpack.c.h.b16 %v322
    %v367 = vunpack.c.l.b16 %v323
    %v368 = vunpack.c.h.b16 %v323
    %v369 = vunpack.c.l.b16 %v324
    %v370 = vunpack.c.h.b16 %v324
    %v371 = vunpack.c.l.b16 %v325
    %v372 = vunpack.c.h.b16 %v325
    %v373 = vunpack.c.l.b16 %v326
    %v374 = vunpack.c.h.b16 %v326
    %v375 = vunpack.c.l.b16 %v327
    %v376 = vunpack.c.h.b16 %v327
    %v377 = vunpack.c.l.b16 %v328
    %v378 = vunpack.c.h.b16 %v328
    %v379 = vunpack.c.l.b16 %v329
    %v380 = vunpack.c.h.b16 %v329
    %v381 = vunpack.c.l.b16 %v330
    %v382 = vunpack.c.h.b16 %v330
    %v383 = vunpack.c.l.b16 %v331
    %v384 = vunpack.c.h.b16 %v331
    %v385 = vunpack.c.l.b16 %v332
    %v386 = vunpack.c.h.b16 %v332
    %v387 = vunpack.c.l.b16 %v333
    %v388 = vunpack.c.h.b16 %v333
    %v389 = vunpack.c.l.b16 %v334
    %v390 = vunpack.c.h.b16 %v334
    %v391 = vpack.c.b16 %v361, %v359
    %v392 = vpack.c.b16 %v362, %v360
    %v393 = vpack.c.b16 %v365, %v363
    %v394 = vpack.c.b16 %v366, %v364
    %v395 = vpack.c.b16 %v369, %v367
    %v396 = vpack.c.b16 %v370, %v368
    %v397 = vpack.c.b16 %v373, %v371
    %v398 = vpack.c.b16 %v374, %v372
    %v399 = vpack.c.b16 %v377, %v375
    %v400 = vpack.c.b16 %v378, %v376
    %v401 = vpack.c.b16 %v381, %v379
    %v402 = vpack.c.b16 %v382, %v380
    %v403 = vpack.c.b16 %v385, %v383
    %v404 = vpack.c.b16 %v386, %v384
    %v405 = vpack.c.b16 %v389, %v387
    %v406 = vpack.c.b16 %v390, %v388
    %423 = vmatprep.subr.bf16.mxu0 %v392
    %424 = vmatpush1.bf16.msra.mxu0 %v391
    %425 = vmatprep.subr.bf16.mxu0 %v394
    %426 = vmatpush1.bf16.msra.mxu0 %v393
    %427 = vmatprep.subr.bf16.mxu0 %v396
    %428 = vmatpush1.bf16.msra.mxu0 %v395
    %429 = vmatprep.subr.bf16.mxu0 %v398
    %430 = vmatpush1.bf16.msra.mxu0 %v397
    %431 = vmatprep.subr.bf16.mxu0 %v400
    %432 = vmatpush1.bf16.msra.mxu0 %v399
    %433 = vmatprep.subr.bf16.mxu0 %v402
    %434 = vmatpush1.bf16.msra.mxu0 %v401
    %435 = vmatprep.subr.bf16.mxu0 %v404
    %436 = vmatpush1.bf16.msra.mxu0 %v403
    %437 = vmatprep.subr.bf16.mxu0 %v406
    %438 = vmatpush1.bf16.msra.mxu0 %v405
    %439 = vmatprep.subr.bf16.mxu0 0
    %440 = vmatpush1.bf16.msra.mxu0 0
    %441 = vmatprep.subr.bf16.mxu0 0
    %442 = vmatpush1.bf16.msra.mxu0 0
    %443 = vmatprep.subr.bf16.mxu0 0
    %444 = vmatpush1.bf16.msra.mxu0 0
    %445 = vmatprep.subr.bf16.mxu0 0
    %446 = vmatpush1.bf16.msra.mxu0 0
    %447 = vmatprep.subr.bf16.mxu0 0
    %448 = vmatpush1.bf16.msra.mxu0 0
    %449 = vmatprep.subr.bf16.mxu0 0
    %450 = vmatpush1.bf16.msra.mxu0 0
    %451 = vmatprep.subr.bf16.mxu0 0
    %452 = vmatpush1.bf16.msra.mxu0 0
    %453 = vmatprep.subr.bf16.mxu0 0
    %454 = vmatpush1.bf16.msra.mxu0 0
    %455 = vmatprep.mubr.bf16.mxu0 0
    %456 = vmatmul.mubr.bf16.gmra.mrb[0].mxu0 %v318
    %v457 = vpop.f32.mrb[0].mxu0
    %v458 = vadd.f32 %v338, %v457
    %v459 = vpop.f32.mrb[0].mxu0
    %v460 = vadd.f32 %v342, %v459
    %v461 = vpop.f32.mrb[0].mxu0
    %v462 = vadd.f32 %v338, %v461
    %v463 = vpop.f32.mrb[0].mxu0
    %v464 = vadd.f32 %v342, %v463
    %465 = vdwg.mxu0
    %v466 = vsub.f32 %v458, %v460
    %v467 = vsub.f32 %v462, %v464
    %v468 = vmul.f32 %v466, 0.5
    %v469 = vmul.f32 %v467, 0.5
    %v470 = vtanh.pop %v468
    %v471 = vtanh.pop %v469
    %v472 = vadd.f32 %v470, 1.0
    %v473 = vadd.f32 %v471, 1.0
    %v474 = vmul.f32 %v472, 0.5
    %v475 = vmul.f32 %v473, 0.5
    %v476 = vsub.f32 %v312, %v313
    %v477 = vsub.f32 %v314, %v315
    %v478 = vmul.f32 %v476, %v474
    %v479 = vmul.f32 %v477, %v475
    %v480 = vadd.f32 %v313, %v478
    %v481 = vadd.f32 %v315, %v479
    %v482 = vlaneseq
    %v483 = vshrl.u32 %v482, 7
    %v484 = vsub.s32 2, %v483
    %v485 = vrot.slane %v57, %v484
    %v486 = vmul.f32 %v480, %v485
    %v487 = vmul.f32 %v481, %v485
    %v488 = vlaneseq
    %v489 = vshrl.u32 %v488, 7
    %v490 = vsub.s32 2, %v489
    %v491 = vrot.slane %v58, %v490
    %v492 = vadd.f32 %v486, %v491
    %v493 = vadd.f32 %v487, %v491
    %v494 = vmax.f32 %v492, 0.0
    %v495 = vmax.f32 %v493, 0.0
    %v496 = vpack.c.bf16 %v495, %v494
    %v497 = vld [vmem:[#allocation5 + $0x180] sm:$0xf]
    %v498 = vld [vmem:[#allocation5 + $0x188] sm:$0xf]
    %v499 = vld [vmem:[#allocation5 + $0x190] sm:$0xf]
    %v500 = vld [vmem:[#allocation5 + $0x198] sm:$0xf]
    %v501 = vld [vmem:[#allocation5 + $0x1a0] sm:$0xf]
    %v502 = vld [vmem:[#allocation5 + $0x1a8] sm:$0xf]
    %v503 = vld [vmem:[#allocation5 + $0x1b0] sm:$0xf]
    %v504 = vld [vmem:[#allocation5 + $0x1b8] sm:$0xf]
    %v505 = vld [vmem:[#allocation5 + $0x1c0] sm:$0xf]
    %v506 = vld [vmem:[#allocation5 + $0x1c8] sm:$0xf]
    %v507 = vld [vmem:[#allocation5 + $0x1d0] sm:$0xf]
    %v508 = vld [vmem:[#allocation5 + $0x1d8] sm:$0xf]
    %v509 = vld [vmem:[#allocation5 + $0x1e0] sm:$0xf]
    %v510 = vld [vmem:[#allocation5 + $0x1e8] sm:$0xf]
    %v511 = vld [vmem:[#allocation5 + $0x1f0] sm:$0xf]
    %v512 = vld [vmem:[#allocation5 + $0x1f8] sm:$0xf]
    %v513 = vlaneseq
    %v514 = vshrl.u32 %v513, 7
    %v515 = vsub.s32 3, %v514
    %v516 = vrot.slane %v57, %v515
    %v533 = vunpack.c.l.b16 %v497
    %v534 = vunpack.c.l.b16 %v498
    %v535 = vunpack.c.l.b16 %v499
    %v536 = vunpack.c.l.b16 %v500
    %v537 = vunpack.c.l.b16 %v501
    %v538 = vunpack.c.l.b16 %v502
    %v539 = vunpack.c.l.b16 %v503
    %v540 = vunpack.c.l.b16 %v504
    %v541 = vunpack.c.l.b16 %v505
    %v542 = vunpack.c.l.b16 %v506
    %v543 = vunpack.c.l.b16 %v507
    %v544 = vunpack.c.l.b16 %v508
    %v545 = vunpack.c.l.b16 %v509
    %v546 = vunpack.c.l.b16 %v510
    %v547 = vunpack.c.l.b16 %v511
    %v548 = vunpack.c.l.b16 %v512
    %v549 = vpack.c.b16 %v534, %v533
    %v550 = vpack.c.b16 %v536, %v535
    %v551 = vpack.c.b16 %v538, %v537
    %v552 = vpack.c.b16 %v540, %v539
    %v553 = vpack.c.b16 %v542, %v541
    %v554 = vpack.c.b16 %v544, %v543
    %v555 = vpack.c.b16 %v546, %v545
    %v556 = vpack.c.b16 %v548, %v547
    %565 = vmatprep.subr.bf16.mxu0 0
    %566 = vmatpush1.bf16.msra.mxu0 %v549
    %567 = vmatprep.subr.bf16.mxu0 0
    %568 = vmatpush1.bf16.msra.mxu0 %v550
    %569 = vmatprep.subr.bf16.mxu0 0
    %570 = vmatpush1.bf16.msra.mxu0 %v551
    %571 = vmatprep.subr.bf16.mxu0 0
    %572 = vmatpush1.bf16.msra.mxu0 %v552
    %573 = vmatprep.subr.bf16.mxu0 0
    %574 = vmatpush1.bf16.msra.mxu0 %v553
    %575 = vmatprep.subr.bf16.mxu0 0
    %576 = vmatpush1.bf16.msra.mxu0 %v554
    %577 = vmatprep.subr.bf16.mxu0 0
    %578 = vmatpush1.bf16.msra.mxu0 %v555
    %579 = vmatprep.subr.bf16.mxu0 0
    %580 = vmatpush1.bf16.msra.mxu0 %v556
    %581 = vmatprep.subr.bf16.mxu0 0
    %582 = vmatpush1.bf16.msra.mxu0 0
    %583 = vmatprep.subr.bf16.mxu0 0
    %584 = vmatpush1.bf16.msra.mxu0 0
    %585 = vmatprep.subr.bf16.mxu0 0
    %586 = vmatpush1.bf16.msra.mxu0 0
    %587 = vmatprep.subr.bf16.mxu0 0
    %588 = vmatpush1.bf16.msra.mxu0 0
    %589 = vmatprep.subr.bf16.mxu0 0
    %590 = vmatpush1.bf16.msra.mxu0 0
    %591 = vmatprep.subr.bf16.mxu0 0
    %592 = vmatpush1.bf16.msra.mxu0 0
    %593 = vmatprep.subr.bf16.mxu0 0
    %594 = vmatpush1.bf16.msra.mxu0 0
    %595 = vmatprep.subr.bf16.mxu0 0
    %596 = vmatpush1.bf16.msra.mxu0 0
    %597 = vmatprep.mubr.bf16.mxu0 0
    %598 = vmatmul.mubr.bf16.gmra.mrb[0].mxu0 %v496
    %v599 = vpop.f32.mrb[0].mxu0
    %v600 = vadd.f32 %v516, %v599
    %v601 = vpop.f32.mrb[0].mxu0
    %v602 = vpop.f32.mrb[0].mxu0
    %v603 = vadd.f32 %v516, %v602
    %v604 = vpop.f32.mrb[0].mxu0
    %605 = vdwg.mxu0
    %606 = vst [vmem:[#allocation8] sm:$0xff] %v600
    %607 = vst [vmem:[#allocation8 + $0x8] sm:$0xff] %v603
    // Predicated region
    $region26: #{tpu_custom_call.1} parent=1 // pred_check
      _
    $region27: #{tpu_custom_call.1} parent=1 // pred_check_branch
      %609 = sbr.rel (0) target = $region29
    $region28: #{tpu_custom_call.1} parent=1 // pred_region
      %s611 = ssub.s32 256, 256
      %612 = vsyncadd [#allocation4], %s611
      %s613 = sshll.u32 [#allocation8], 4
      %s614 = int_to_ptr.vmem [resolvable:$true] %s613
      %619 = dma.vmem_to_hbm [thread:$0]  %s614, 256, %s3, [#allocation4], 128, 128, 8
    $region29: #{tpu_custom_call.1} parent=1 // pred_fallthru
      _
    // Predicated region
    $region30: #{tpu_custom_call.1} parent=1 // pred_check
      _
    $region31: #{tpu_custom_call.1} parent=1 // pred_check_branch
      %621 = sbr.rel (0) target = $region33
    $region32: #{tpu_custom_call.1} parent=1 // pred_region
      %622 = dma.done [#allocation4], 256
    $region33: #{tpu_custom_call.1} parent=1 // pred_fallthru
      _
    %623 = vsyncpa [#allocation3], 1
    %624 = vsyncpa [#allocation6], 1
    %625 = vsyncpa [#allocation4], 1

</llo_original>
